<compile_context>
chip_gen: v7x
topology: tpu7x:2x2x1
jax: 0.10.0
libtpu: 0.0.40
codegen_flags: <defaults>
</compile_context>

<pallas_src>
import jax
import jax.numpy as jnp
from jax.experimental import pallas as pl
from jax.experimental.pallas import tpu as pltpu


def _mlp_kernel(x_ref, w1_ref, b1_ref, w2_ref, b2_ref, w3_ref, b3_ref, o_ref):
    x = x_ref[...]                                               # (TB, 32) bf16

    # fc1 + ReLU (f32 accumulate / elementwise, bf16 back into the MXU)
    h1 = jnp.dot(x, w1_ref[...], preferred_element_type=jnp.float32) + b1_ref[...]
    h1 = jnp.maximum(h1, 0.0).astype(jnp.bfloat16)               # (TB, 128)

    # fc2 + ReLU
    h2 = jnp.dot(h1, w2_ref[...], preferred_element_type=jnp.float32) + b2_ref[...]
    h2 = jnp.maximum(h2, 0.0).astype(jnp.bfloat16)               # (TB, 128)

    # fc3 (padded to 128 output lanes -> unmasked, lane-dense store)
    o_ref[...] = (
        jnp.dot(h2, w3_ref[...], preferred_element_type=jnp.float32) + b3_ref[...]
    ).astype(o_ref.dtype)                                        # (TB, 128) f32


def classifier_forward(x, params, *, block_b=256):
    """x: (B, input_dim) float32.  params: dict of (pre-transposed) weights/biases."""
    w1, b1, w2, b2, w3, b3 = (
        params["w1"], params["b1"], params["w2"],
        params["b2"], params["w3"], params["b3"],
    )
    B, input_dim = x.shape
    hidden_dim = w1.shape[1]
    num_classes = w3.shape[1]

    # --- Pad batch to a multiple of the batch tile (and the f32/bf16 sublane). ---
    tb = block_b
    b_pad = pl.cdiv(B, tb) * tb
    if b_pad != B:
        x = jnp.pad(x, ((0, b_pad - B), (0, 0)))

    # --- Pad fc3 to 128 output lanes (lane-dense output path). ---
    nc_pad = pl.cdiv(num_classes, 128) * 128
    if nc_pad != num_classes:
        w3 = jnp.pad(w3, ((0, 0), (0, nc_pad - num_classes)))
        b3 = jnp.pad(b3, ((0, 0), (0, nc_pad - num_classes)))

    # --- bf16 MXU operands, f32 biases / accumulation. ---
    x_bf = x.astype(jnp.bfloat16)
    w1_bf = w1.astype(jnp.bfloat16)
    w2_bf = w2.astype(jnp.bfloat16)
    w3_bf = w3.astype(jnp.bfloat16)
    b1_f = b1.astype(jnp.float32)
    b2_f = b2.astype(jnp.float32)
    b3_f = b3.astype(jnp.float32)

    grid = (b_pad // tb,)

    # Weights/biases: same block for every batch tile -> stay VMEM-resident.
    resident = lambda a: pl.BlockSpec(a.shape, lambda i: tuple(0 for _ in a.shape))

    out_padded = pl.pallas_call(
        _mlp_kernel,
        out_shape=jax.ShapeDtypeStruct((b_pad, nc_pad), jnp.float32),
        grid=grid,
        in_specs=[
            pl.BlockSpec((tb, input_dim), lambda i: (i, 0)),   # x: tiled over batch
            resident(w1_bf), resident(b1_f),
            resident(w2_bf), resident(b2_f),
            resident(w3_bf), resident(b3_f),
        ],
        out_specs=pl.BlockSpec((tb, nc_pad), lambda i: (i, 0)),
        compiler_params=pltpu.CompilerParams(
            dimension_semantics=("parallel",),
        ),
    )(x_bf, w1_bf, b1_f, w2_bf, b2_f, w3_bf, b3_f)

    # Strip batch + class padding.
    return out_padded[:B, :num_classes]


def init_params(key, input_dim=32, hidden_dim=128, num_classes=10):
    """Deterministic init mimicking nn.Linear's uniform(-1/sqrt(fan_in), 1/sqrt(fan_in))."""
    ks = jax.random.split(key, 6)

    def linear(kw, kb, fan_in, fan_out):
        bound = 1.0 / jnp.sqrt(fan_in)
        # Stored transposed: (in_features, out_features)
        w = jax.random.uniform(kw, (fan_in, fan_out), jnp.float32, -bound, bound)
        b = jax.random.uniform(kb, (1, fan_out), jnp.float32, -bound, bound)
        return w, b

    w1, b1 = linear(ks[0], ks[1], input_dim, hidden_dim)
    w2, b2 = linear(ks[2], ks[3], hidden_dim, hidden_dim)
    w3, b3 = linear(ks[4], ks[5], hidden_dim, num_classes)
    return {"w1": w1, "b1": b1, "w2": w2, "b2": b2, "w3": w3, "b3": b3}


if __name__ == "__main__":
    key = jax.random.PRNGKey(0)
    k_params, k_x = jax.random.split(key)

    B, input_dim, hidden_dim, num_classes = 8, 32, 128, 10
    params = init_params(k_params, input_dim, hidden_dim, num_classes)
    x = jax.random.normal(k_x, (B, input_dim), dtype=jnp.float32)

    out = classifier_forward(x, params)
    jax.block_until_ready(out)

    # Pure-JAX f32 reference check (kernel uses bf16 MXU operands -> loose tol).
    h = jnp.maximum(x @ params["w1"] + params["b1"], 0.0)
    h = jnp.maximum(h @ params["w2"] + params["b2"], 0.0)
    ref = h @ params["w3"] + params["b3"]
    assert out.shape == (B, num_classes)
    assert jnp.allclose(out, ref, atol=5e-2, rtol=5e-2), (
        float(jnp.max(jnp.abs(out - ref)))
    )

    print("KERNEL_OK")
</pallas_src>

<mosaic_0001>
module attributes {stable_mosaic.version = 11 : i64} {
  func.func @_mlp_kernel(%arg0: i32, %arg1: memref<256x32xbf16, #tpu.memory_space<vmem>>, %arg2: memref<32x128xbf16, #tpu.memory_space<vmem>>, %arg3: memref<1x128xf32, #tpu.memory_space<vmem>>, %arg4: memref<128x128xbf16, #tpu.memory_space<vmem>>, %arg5: memref<1x128xf32, #tpu.memory_space<vmem>>, %arg6: memref<128x128xbf16, #tpu.memory_space<vmem>>, %arg7: memref<1x128xf32, #tpu.memory_space<vmem>>, %arg8: memref<256x128xf32, #tpu.memory_space<vmem>>) attributes {dimension_semantics = [#tpu.dimension_semantics<parallel>], iteration_bounds = array<i64: 1>, scalar_prefetch = 0 : i64, scratch_operands = 0 : i64, tpu.core_type = #tpu.core_type<tc>, window_params = [{transform_indices = @transform_0, window_bounds = array<i64: 256, 32>}, {pipeline_mode = #tpu.pipeline_mode<synchronous>, transform_indices = @transform_1, window_bounds = array<i64: 32, 128>}, {pipeline_mode = #tpu.pipeline_mode<synchronous>, transform_indices = @transform_2, window_bounds = array<i64: 1, 128>}, {pipeline_mode = #tpu.pipeline_mode<synchronous>, transform_indices = @transform_3, window_bounds = array<i64: 128, 128>}, {pipeline_mode = #tpu.pipeline_mode<synchronous>, transform_indices = @transform_4, window_bounds = array<i64: 1, 128>}, {pipeline_mode = #tpu.pipeline_mode<synchronous>, transform_indices = @transform_5, window_bounds = array<i64: 128, 128>}, {pipeline_mode = #tpu.pipeline_mode<synchronous>, transform_indices = @transform_6, window_bounds = array<i64: 1, 128>}, {transform_indices = @transform_7, window_bounds = array<i64: 256, 128>}]} {
    %c0 = arith.constant 0 : index
    %c0_0 = arith.constant 0 : index
    %0 = vector.load %arg1[%c0, %c0_0] : memref<256x32xbf16, #tpu.memory_space<vmem>>, vector<256x32xbf16>
    %c0_1 = arith.constant 0 : index
    %c0_2 = arith.constant 0 : index
    %1 = vector.load %arg2[%c0_1, %c0_2] : memref<32x128xbf16, #tpu.memory_space<vmem>>, vector<32x128xbf16>
    %cst = arith.constant dense<0.000000e+00> : vector<256x128xf32>
    %2 = tpu.matmul %0, %1, %cst {dimension_numbers = #tpu.dot_dimension_numbers<[1], [0], [0], [1], [0, 0, 1, 1], [], []>} : vector<256x32xbf16>, vector<32x128xbf16>, vector<256x128xf32> -> vector<256x128xf32>
    %c0_3 = arith.constant 0 : index
    %c0_4 = arith.constant 0 : index
    %3 = vector.load %arg3[%c0_3, %c0_4] : memref<1x128xf32, #tpu.memory_space<vmem>>, vector<1x128xf32>
    %4 = vector.broadcast %3 : vector<1x128xf32> to vector<256x128xf32>
    %5 = arith.addf %2, %4 : vector<256x128xf32>
    %cst_5 = arith.constant 0.000000e+00 : f32
    %6 = vector.broadcast %cst_5 : f32 to vector<256x128xf32>
    %7 = arith.maximumf %5, %6 : vector<256x128xf32>
    %8 = arith.truncf %7 : vector<256x128xf32> to vector<256x128xbf16>
    %c0_6 = arith.constant 0 : index
    %c0_7 = arith.constant 0 : index
    %9 = vector.load %arg4[%c0_6, %c0_7] : memref<128x128xbf16, #tpu.memory_space<vmem>>, vector<128x128xbf16>
    %cst_8 = arith.constant dense<0.000000e+00> : vector<256x128xf32>
    %10 = tpu.matmul %8, %9, %cst_8 {dimension_numbers = #tpu.dot_dimension_numbers<[1], [0], [0], [1], [0, 0, 1, 1], [], []>} : vector<256x128xbf16>, vector<128x128xbf16>, vector<256x128xf32> -> vector<256x128xf32>
    %c0_9 = arith.constant 0 : index
    %c0_10 = arith.constant 0 : index
    %11 = vector.load %arg5[%c0_9, %c0_10] : memref<1x128xf32, #tpu.memory_space<vmem>>, vector<1x128xf32>
    %12 = vector.broadcast %11 : vector<1x128xf32> to vector<256x128xf32>
    %13 = arith.addf %10, %12 : vector<256x128xf32>
    %cst_11 = arith.constant 0.000000e+00 : f32
    %14 = vector.broadcast %cst_11 : f32 to vector<256x128xf32>
    %15 = arith.maximumf %13, %14 : vector<256x128xf32>
    %16 = arith.truncf %15 : vector<256x128xf32> to vector<256x128xbf16>
    %c0_12 = arith.constant 0 : index
    %c0_13 = arith.constant 0 : index
    %17 = vector.load %arg6[%c0_12, %c0_13] : memref<128x128xbf16, #tpu.memory_space<vmem>>, vector<128x128xbf16>
    %cst_14 = arith.constant dense<0.000000e+00> : vector<256x128xf32>
    %18 = tpu.matmul %16, %17, %cst_14 {dimension_numbers = #tpu.dot_dimension_numbers<[1], [0], [0], [1], [0, 0, 1, 1], [], []>} : vector<256x128xbf16>, vector<128x128xbf16>, vector<256x128xf32> -> vector<256x128xf32>
    %c0_15 = arith.constant 0 : index
    %c0_16 = arith.constant 0 : index
    %19 = vector.load %arg7[%c0_15, %c0_16] : memref<1x128xf32, #tpu.memory_space<vmem>>, vector<1x128xf32>
    %20 = vector.broadcast %19 : vector<1x128xf32> to vector<256x128xf32>
    %21 = arith.addf %18, %20 : vector<256x128xf32>
    %c0_17 = arith.constant 0 : index
    %c0_18 = arith.constant 0 : index
    %22 = vector.load %arg8[%c0_17, %c0_18] : memref<256x128xf32, #tpu.memory_space<vmem>>, vector<256x128xf32>
    tpu.vector_store %arg8[%c0_17, %c0_18], %21 {strides = array<i32>} : memref<256x128xf32, #tpu.memory_space<vmem>>, vector<256x128xf32>,
    return
  }
  func.func @transform_0(%arg0: i32) -> (i32, i32) {
    %c0_i32 = arith.constant 0 : i32
    %c0_i32_0 = arith.constant 0 : i32
    return %arg0, %c0_i32 : i32, i32
  }
  func.func @transform_1(%arg0: i32) -> (i32, i32) {
    %c0_i32 = arith.constant 0 : i32
    %c0_i32_0 = arith.constant 0 : i32
    %c0_i32_1 = arith.constant 0 : i32
    return %c0_i32, %c0_i32_0 : i32, i32
  }
  func.func @transform_2(%arg0: i32) -> (i32, i32) {
    %c0_i32 = arith.constant 0 : i32
    %c0_i32_0 = arith.constant 0 : i32
    %c0_i32_1 = arith.constant 0 : i32
    return %c0_i32, %c0_i32_0 : i32, i32
  }
  func.func @transform_3(%arg0: i32) -> (i32, i32) {
    %c0_i32 = arith.constant 0 : i32
    %c0_i32_0 = arith.constant 0 : i32
    %c0_i32_1 = arith.constant 0 : i32
    return %c0_i32, %c0_i32_0 : i32, i32
  }
  func.func @transform_4(%arg0: i32) -> (i32, i32) {
    %c0_i32 = arith.constant 0 : i32
    %c0_i32_0 = arith.constant 0 : i32
    %c0_i32_1 = arith.constant 0 : i32
    return %c0_i32, %c0_i32_0 : i32, i32
  }
  func.func @transform_5(%arg0: i32) -> (i32, i32) {
    %c0_i32 = arith.constant 0 : i32
    %c0_i32_0 = arith.constant 0 : i32
    %c0_i32_1 = arith.constant 0 : i32
    return %c0_i32, %c0_i32_0 : i32, i32
  }
  func.func @transform_6(%arg0: i32) -> (i32, i32) {
    %c0_i32 = arith.constant 0 : i32
    %c0_i32_0 = arith.constant 0 : i32
    %c0_i32_1 = arith.constant 0 : i32
    return %c0_i32, %c0_i32_0 : i32, i32
  }
  func.func @transform_7(%arg0: i32) -> (i32, i32) {
    %c0_i32 = arith.constant 0 : i32
    %c0_i32_0 = arith.constant 0 : i32
    return %arg0, %c0_i32 : i32, i32
  }
}

</mosaic_0001>

<llo_original>
// kernel: tpu_custom_call.1
$region0: #{tpu_custom_call.1}
  #allocation0 [shape = 'u32[]', space=smem, size = 0x4, offset = 0x4, fixed_abs, tag = 'smem constant byte address 0x4 - core index']
  #allocation1 [shape = 'u32[144,128]{1,0:T(1,128)}', space=vmem, size = 0x12000, scoped, tag = 'internal scratch']
  %s0 = inlined_call_operand.vmem [shape: bf16[256,32], index: 0, kind: input, shape index: {}]
  %s1 = inlined_call_operand.vmem [shape: bf16[32,128], index: 1, kind: input, shape index: {}]
  %s2 = inlined_call_operand.vmem [shape: f32[1,128], index: 2, kind: input, shape index: {}]
  %s3 = inlined_call_operand.vmem [shape: bf16[128,128], index: 3, kind: input, shape index: {}]
  %s4 = inlined_call_operand.vmem [shape: f32[1,128], index: 4, kind: input, shape index: {}]
  %s5 = inlined_call_operand.vmem [shape: bf16[128,128], index: 5, kind: input, shape index: {}]
  %s6 = inlined_call_operand.vmem [shape: f32[1,128], index: 6, kind: input, shape index: {}]
  %s7 = inlined_call_operand.hbm [shape: f32[256,128], index: 7, kind: output, shape index: {}]
  %s8 = sld [smem:[#allocation0]]
  $region38: #{tpu_custom_call.1} parent=0
    _
  %s10 = ssub.s32 1, %s8
  %s11 = scalar_select 0, %s10, %s8
  $region1: #{tpu_custom_call.1} parent=0
    #allocation2 [shape = 'u8[131072]{0}', space=vmem, size = 0x20000, scoped, tag = 'output window, operand 0, single buffered']
    #allocation3 [shape = 's32[1]{0}', space=sflag, size = 0x4, scoped, tag = 'scoped memory for tpu_custom_call.1']
    %12 = vsyncpa [#allocation3], 0
    // Predicated region
    $region2: #{tpu_custom_call.1} parent=1 // pred_check
      _
    $region3: #{tpu_custom_call.1} parent=1 // pred_check_branch
      %14 = sbr.rel (0) target = $region5
    $region4: #{tpu_custom_call.1} parent=1 // pred_region
      _
    $region5: #{tpu_custom_call.1} parent=1 // pred_fallthru
      _
    // Predicated region
    $region6: #{tpu_custom_call.1} parent=1 // pred_check
      _
    $region7: #{tpu_custom_call.1} parent=1 // pred_check_branch
      %16 = sbr.rel (0) target = $region9
    $region8: #{tpu_custom_call.1} parent=1 // pred_region
      _
    $region9: #{tpu_custom_call.1} parent=1 // pred_fallthru
      _
    // Predicated region
    $region10: #{tpu_custom_call.1} parent=1 // pred_check
      _
    $region11: #{tpu_custom_call.1} parent=1 // pred_check_branch
      %18 = sbr.rel (0) target = $region13
    $region12: #{tpu_custom_call.1} parent=1 // pred_region
      _
    $region13: #{tpu_custom_call.1} parent=1 // pred_fallthru
      _
    // Predicated region
    $region14: #{tpu_custom_call.1} parent=1 // pred_check
      _
    $region15: #{tpu_custom_call.1} parent=1 // pred_check_branch
      %20 = sbr.rel (0) target = $region17
    $region16: #{tpu_custom_call.1} parent=1 // pred_region
      _
    $region17: #{tpu_custom_call.1} parent=1 // pred_fallthru
      _
    // Predicated region
    $region18: #{tpu_custom_call.1} parent=1 // pred_check
      _
    $region19: #{tpu_custom_call.1} parent=1 // pred_check_branch
      %22 = sbr.rel (0) target = $region21
    $region20: #{tpu_custom_call.1} parent=1 // pred_region
      _
    $region21: #{tpu_custom_call.1} parent=1 // pred_fallthru
      _
    // Predicated region
    $region22: #{tpu_custom_call.1} parent=1 // pred_check
      _
    $region23: #{tpu_custom_call.1} parent=1 // pred_check_branch
      %24 = sbr.rel (0) target = $region25
    $region24: #{tpu_custom_call.1} parent=1 // pred_region
      _
    $region25: #{tpu_custom_call.1} parent=1 // pred_fallthru
      _
    // Predicated region
    $region26: #{tpu_custom_call.1} parent=1 // pred_check
      _
    $region27: #{tpu_custom_call.1} parent=1 // pred_check_branch
      %26 = sbr.rel (0) target = $region29
    $region28: #{tpu_custom_call.1} parent=1 // pred_region
      _
    $region29: #{tpu_custom_call.1} parent=1 // pred_fallthru
      _
    %v28 = vld [vmem:[%s0] sm:$0xf]
    %v29 = vld [vmem:[%s0 + $0x4] sm:$0xf]
    %v30 = vld [vmem:[%s0 + $0x8] sm:$0xf]
    %v31 = vld [vmem:[%s0 + $0xc] sm:$0xf]
    %v32 = vld [vmem:[%s0 + $0x10] sm:$0xf]
    %v33 = vld [vmem:[%s0 + $0x14] sm:$0xf]
    %v34 = vld [vmem:[%s0 + $0x18] sm:$0xf]
    %v35 = vld [vmem:[%s0 + $0x1c] sm:$0xf]
    %v36 = vld [vmem:[%s0 + $0x20] sm:$0xf]
    %v37 = vld [vmem:[%s0 + $0x24] sm:$0xf]
    %v38 = vld [vmem:[%s0 + $0x28] sm:$0xf]
    %v39 = vld [vmem:[%s0 + $0x2c] sm:$0xf]
    %v40 = vld [vmem:[%s0 + $0x30] sm:$0xf]
    %v41 = vld [vmem:[%s0 + $0x34] sm:$0xf]
    %v42 = vld [vmem:[%s0 + $0x38] sm:$0xf]
    %v43 = vld [vmem:[%s0 + $0x3c] sm:$0xf]
    %v44 = vld [vmem:[%s0 + $0x40] sm:$0xf]
    %v45 = vld [vmem:[%s0 + $0x44] sm:$0xf]
    %v46 = vld [vmem:[%s0 + $0x48] sm:$0xf]
    %v47 = vld [vmem:[%s0 + $0x4c] sm:$0xf]
    %v48 = vld [vmem:[%s0 + $0x50] sm:$0xf]
    %v49 = vld [vmem:[%s0 + $0x54] sm:$0xf]
    %v50 = vld [vmem:[%s0 + $0x58] sm:$0xf]
    %v51 = vld [vmem:[%s0 + $0x5c] sm:$0xf]
    %v52 = vld [vmem:[%s0 + $0x60] sm:$0xf]
    %v53 = vld [vmem:[%s0 + $0x64] sm:$0xf]
    %v54 = vld [vmem:[%s0 + $0x68] sm:$0xf]
    %v55 = vld [vmem:[%s0 + $0x6c] sm:$0xf]
    %v56 = vld [vmem:[%s0 + $0x70] sm:$0xf]
    %v57 = vld [vmem:[%s0 + $0x74] sm:$0xf]
    %v58 = vld [vmem:[%s0 + $0x78] sm:$0xf]
    %v59 = vld [vmem:[%s0 + $0x7c] sm:$0xf]
    %v60 = vld [vmem:[%s1] sm:$0xf]
    %v61 = vld [vmem:[%s1 + $0x4] sm:$0xf]
    %v62 = vld [vmem:[%s1 + $0x8] sm:$0xf]
    %v63 = vld [vmem:[%s1 + $0xc] sm:$0xf]
    %v64 = vld [vmem:[%s2] sm:$0x1]
    %v66 = vlaneseq
    %v67 = vshrl.u32 %v66, 7
    %v68 = vsub.s32 0, %v67
    %v69 = vrot.slane %v64, %v68
    %v103 = vunpack.c.l.b16 %v28
    %v104 = vunpack.c.l.b16 %v29
    %v105 = vunpack.c.l.b16 %v30
    %v106 = vunpack.c.l.b16 %v31
    %v107 = vunpack.c.l.b16 %v32
    %v108 = vunpack.c.l.b16 %v33
    %v109 = vunpack.c.l.b16 %v34
    %v110 = vunpack.c.l.b16 %v35
    %v111 = vunpack.c.l.b16 %v36
    %v112 = vunpack.c.l.b16 %v37
    %v113 = vunpack.c.l.b16 %v38
    %v114 = vunpack.c.l.b16 %v39
    %v115 = vunpack.c.l.b16 %v40
    %v116 = vunpack.c.l.b16 %v41
    %v117 = vunpack.c.l.b16 %v42
    %v118 = vunpack.c.l.b16 %v43
    %v119 = vunpack.c.l.b16 %v44
    %v120 = vunpack.c.l.b16 %v45
    %v121 = vunpack.c.l.b16 %v46
    %v122 = vunpack.c.l.b16 %v47
    %v123 = vunpack.c.l.b16 %v48
    %v124 = vunpack.c.l.b16 %v49
    %v125 = vunpack.c.l.b16 %v50
    %v126 = vunpack.c.l.b16 %v51
    %v127 = vunpack.c.l.b16 %v52
    %v128 = vunpack.c.l.b16 %v53
    %v129 = vunpack.c.l.b16 %v54
    %v130 = vunpack.c.l.b16 %v55
    %v131 = vunpack.c.l.b16 %v56
    %v132 = vunpack.c.l.b16 %v57
    %v133 = vunpack.c.l.b16 %v58
    %v134 = vunpack.c.l.b16 %v59
    %v135 = vpack.c.b16 %v104, %v103
    %v136 = vpack.c.b16 %v106, %v105
    %v137 = vpack.c.b16 %v108, %v107
    %v138 = vpack.c.b16 %v110, %v109
    %v139 = vpack.c.b16 %v112, %v111
    %v140 = vpack.c.b16 %v114, %v113
    %v141 = vpack.c.b16 %v116, %v115
    %v142 = vpack.c.b16 %v118, %v117
    %v143 = vpack.c.b16 %v120, %v119
    %v144 = vpack.c.b16 %v122, %v121
    %v145 = vpack.c.b16 %v124, %v123
    %v146 = vpack.c.b16 %v126, %v125
    %v147 = vpack.c.b16 %v128, %v127
    %v148 = vpack.c.b16 %v130, %v129
    %v149 = vpack.c.b16 %v132, %v131
    %v150 = vpack.c.b16 %v134, %v133
    %v155 = vunpack.c.l.b16 %v60
    %v156 = vunpack.c.l.b16 %v61
    %v157 = vunpack.c.l.b16 %v62
    %v158 = vunpack.c.l.b16 %v63
    %v159 = vpack.c.b16 %v156, %v155
    %v160 = vpack.c.b16 %v158, %v157
    %vm163 = vcmask 261120
    %v165 = vsel %vm163, %v135, 0
    %v168 = vsel %vm163, %v136, 0
    %v171 = vsel %vm163, %v137, 0
    %v174 = vsel %vm163, %v138, 0
    %v177 = vsel %vm163, %v139, 0
    %v180 = vsel %vm163, %v140, 0
    %v183 = vsel %vm163, %v141, 0
    %v186 = vsel %vm163, %v142, 0
    %v189 = vsel %vm163, %v143, 0
    %v192 = vsel %vm163, %v144, 0
    %v195 = vsel %vm163, %v145, 0
    %v198 = vsel %vm163, %v146, 0
    %v201 = vsel %vm163, %v147, 0
    %v204 = vsel %vm163, %v148, 0
    %v207 = vsel %vm163, %v149, 0
    %v210 = vsel %vm163, %v150, 0
    %212 = vmatprep.subr.bf16.mxu0 0
    %213 = vmatpush1.bf16.msra.mxu0 %v159
    %214 = vmatprep.subr.bf16.mxu0 0
    %215 = vmatpush1.bf16.msra.mxu0 %v160
    %216 = vmatprep.subr.bf16.mxu0 0
    %217 = vmatpush1.bf16.msra.mxu0 0
    %218 = vmatprep.subr.bf16.mxu0 0
    %219 = vmatpush1.bf16.msra.mxu0 0
    %220 = vmatprep.subr.bf16.mxu0 0
    %221 = vmatpush1.bf16.msra.mxu0 0
    %222 = vmatprep.subr.bf16.mxu0 0
    %223 = vmatpush1.bf16.msra.mxu0 0
    %224 = vmatprep.subr.bf16.mxu0 0
    %225 = vmatpush1.bf16.msra.mxu0 0
    %226 = vmatprep.subr.bf16.mxu0 0
    %227 = vmatpush1.bf16.msra.mxu0 0
    %228 = vmatprep.subr.bf16.mxu0 0
    %229 = vmatpush1.bf16.msra.mxu0 0
    %230 = vmatprep.subr.bf16.mxu0 0
    %231 = vmatpush1.bf16.msra.mxu0 0
    %232 = vmatprep.subr.bf16.mxu0 0
    %233 = vmatpush1.bf16.msra.mxu0 0
    %234 = vmatprep.subr.bf16.mxu0 0
    %235 = vmatpush1.bf16.msra.mxu0 0
    %236 = vmatprep.subr.bf16.mxu0 0
    %237 = vmatpush1.bf16.msra.mxu0 0
    %238 = vmatprep.subr.bf16.mxu0 0
    %239 = vmatpush1.bf16.msra.mxu0 0
    %240 = vmatprep.subr.bf16.mxu0 0
    %241 = vmatpush1.bf16.msra.mxu0 0
    %242 = vmatprep.subr.bf16.mxu0 0
    %243 = vmatpush1.bf16.msra.mxu0 0
    %244 = vmatprep.mubr.bf16.mxu0 0
    %245 = vmatmul.mubr.bf16.gmra.mrb[0].mxu0 %v165
    %v246 = vpop.f32.mrb[0].mxu0
    %v247 = vadd.f32 %v69, %v246
    %v248 = vpop.f32.mrb[0].mxu0
    %v249 = vpop.f32.mrb[0].mxu0
    %v250 = vadd.f32 %v69, %v249
    %v251 = vpop.f32.mrb[0].mxu0
    %252 = vmatprep.mubr.bf16.mxu0 0
    %253 = vmatmul.mubr.bf16.gmra.mrb[0].mxu0 %v168
    %v254 = vpop.f32.mrb[0].mxu0
    %v255 = vadd.f32 %v69, %v254
    %v256 = vpop.f32.mrb[0].mxu0
    %v257 = vpop.f32.mrb[0].mxu0
    %v258 = vadd.f32 %v69, %v257
    %v259 = vpop.f32.mrb[0].mxu0
    %260 = vmatprep.mubr.bf16.mxu0 0
    %261 = vmatmul.mubr.bf16.gmra.mrb[0].mxu0 %v171
    %v262 = vpop.f32.mrb[0].mxu0
    %v263 = vadd.f32 %v69, %v262
    %v264 = vpop.f32.mrb[0].mxu0
    %v265 = vpop.f32.mrb[0].mxu0
    %v266 = vadd.f32 %v69, %v265
    %v267 = vpop.f32.mrb[0].mxu0
    %268 = vmatprep.mubr.bf16.mxu0 0
    %269 = vmatmul.mubr.bf16.gmra.mrb[0].mxu0 %v174
    %v270 = vpop.f32.mrb[0].mxu0
    %v271 = vadd.f32 %v69, %v270
    %v272 = vpop.f32.mrb[0].mxu0
    %v273 = vpop.f32.mrb[0].mxu0
    %v274 = vadd.f32 %v69, %v273
    %v275 = vpop.f32.mrb[0].mxu0
    %276 = vmatprep.mubr.bf16.mxu0 0
    %277 = vmatmul.mubr.bf16.gmra.mrb[0].mxu0 %v177
    %v278 = vpop.f32.mrb[0].mxu0
    %v279 = vadd.f32 %v69, %v278
    %v280 = vpop.f32.mrb[0].mxu0
    %v281 = vpop.f32.mrb[0].mxu0
    %v282 = vadd.f32 %v69, %v281
    %v283 = vpop.f32.mrb[0].mxu0
    %284 = vmatprep.mubr.bf16.mxu0 0
    %285 = vmatmul.mubr.bf16.gmra.mrb[0].mxu0 %v180
    %v286 = vpop.f32.mrb[0].mxu0
    %v287 = vadd.f32 %v69, %v286
    %v288 = vpop.f32.mrb[0].mxu0
    %v289 = vpop.f32.mrb[0].mxu0
    %v290 = vadd.f32 %v69, %v289
    %v291 = vpop.f32.mrb[0].mxu0
    %292 = vmatprep.mubr.bf16.mxu0 0
    %293 = vmatmul.mubr.bf16.gmra.mrb[0].mxu0 %v183
    %v294 = vpop.f32.mrb[0].mxu0
    %v295 = vadd.f32 %v69, %v294
    %v296 = vpop.f32.mrb[0].mxu0
    %v297 = vpop.f32.mrb[0].mxu0
    %v298 = vadd.f32 %v69, %v297
    %v299 = vpop.f32.mrb[0].mxu0
    %300 = vmatprep.mubr.bf16.mxu0 0
    %301 = vmatmul.mubr.bf16.gmra.mrb[0].mxu0 %v186
    %v302 = vpop.f32.mrb[0].mxu0
    %v303 = vadd.f32 %v69, %v302
    %v304 = vpop.f32.mrb[0].mxu0
    %v305 = vpop.f32.mrb[0].mxu0
    %v306 = vadd.f32 %v69, %v305
    %v307 = vpop.f32.mrb[0].mxu0
    %308 = vmatprep.mubr.bf16.mxu0 0
    %309 = vmatmul.mubr.bf16.gmra.mrb[0].mxu0 %v189
    %v310 = vpop.f32.mrb[0].mxu0
    %v311 = vadd.f32 %v69, %v310
    %v312 = vpop.f32.mrb[0].mxu0
    %v313 = vpop.f32.mrb[0].mxu0
    %v314 = vadd.f32 %v69, %v313
    %v315 = vpop.f32.mrb[0].mxu0
    %316 = vmatprep.mubr.bf16.mxu0 0
    %317 = vmatmul.mubr.bf16.gmra.mrb[0].mxu0 %v192
    %v318 = vpop.f32.mrb[0].mxu0
    %v319 = vadd.f32 %v69, %v318
    %v320 = vpop.f32.mrb[0].mxu0
    %v321 = vpop.f32.mrb[0].mxu0
    %v322 = vadd.f32 %v69, %v321
    %v323 = vpop.f32.mrb[0].mxu0
    %324 = vmatprep.mubr.bf16.mxu0 0
    %325 = vmatmul.mubr.bf16.gmra.mrb[0].mxu0 %v195
    %v326 = vpop.f32.mrb[0].mxu0
    %v327 = vadd.f32 %v69, %v326
    %v328 = vpop.f32.mrb[0].mxu0
    %v329 = vpop.f32.mrb[0].mxu0
    %v330 = vadd.f32 %v69, %v329
    %v331 = vpop.f32.mrb[0].mxu0
    %332 = vmatprep.mubr.bf16.mxu0 0
    %333 = vmatmul.mubr.bf16.gmra.mrb[0].mxu0 %v198
    %v334 = vpop.f32.mrb[0].mxu0
    %v335 = vadd.f32 %v69, %v334
    %v336 = vpop.f32.mrb[0].mxu0
    %v337 = vpop.f32.mrb[0].mxu0
    %v338 = vadd.f32 %v69, %v337
    %v339 = vpop.f32.mrb[0].mxu0
    %340 = vmatprep.mubr.bf16.mxu0 0
    %341 = vmatmul.mubr.bf16.gmra.mrb[0].mxu0 %v201
    %v342 = vpop.f32.mrb[0].mxu0
    %v343 = vadd.f32 %v69, %v342
    %v344 = vpop.f32.mrb[0].mxu0
    %v345 = vpop.f32.mrb[0].mxu0
    %v346 = vadd.f32 %v69, %v345
    %v347 = vpop.f32.mrb[0].mxu0
    %348 = vmatprep.mubr.bf16.mxu0 0
    %349 = vmatmul.mubr.bf16.gmra.mrb[0].mxu0 %v204
    %v350 = vpop.f32.mrb[0].mxu0
    %v351 = vadd.f32 %v69, %v350
    %v352 = vpop.f32.mrb[0].mxu0
    %v353 = vpop.f32.mrb[0].mxu0
    %v354 = vadd.f32 %v69, %v353
    %v355 = vpop.f32.mrb[0].mxu0
    %356 = vmatprep.mubr.bf16.mxu0 0
    %357 = vmatmul.mubr.bf16.gmra.mrb[0].mxu0 %v207
    %v358 = vpop.f32.mrb[0].mxu0
    %v359 = vadd.f32 %v69, %v358
    %v360 = vpop.f32.mrb[0].mxu0
    %v361 = vpop.f32.mrb[0].mxu0
    %v362 = vadd.f32 %v69, %v361
    %v363 = vpop.f32.mrb[0].mxu0
    %364 = vmatprep.mubr.bf16.mxu0 0
    %365 = vmatmul.mubr.bf16.gmra.mrb[0].mxu0 %v210
    %v366 = vpop.f32.mrb[0].mxu0
    %v367 = vadd.f32 %v69, %v366
    %v368 = vpop.f32.mrb[0].mxu0
    %v369 = vpop.f32.mrb[0].mxu0
    %v370 = vadd.f32 %v69, %v369
    %v371 = vpop.f32.mrb[0].mxu0
    %372 = vdwg.mxu0
    %v373 = vmax.f32 %v247, 0.0
    %v374 = vmax.f32 %v250, 0.0
    %v375 = vmax.f32 %v255, 0.0
    %v376 = vmax.f32 %v258, 0.0
    %v377 = vmax.f32 %v263, 0.0
    %v378 = vmax.f32 %v266, 0.0
    %v379 = vmax.f32 %v271, 0.0
    %v380 = vmax.f32 %v274, 0.0
    %v381 = vmax.f32 %v279, 0.0
    %v382 = vmax.f32 %v282, 0.0
    %v383 = vmax.f32 %v287, 0.0
    %v384 = vmax.f32 %v290, 0.0
    %v385 = vmax.f32 %v295, 0.0
    %v386 = vmax.f32 %v298, 0.0
    %v387 = vmax.f32 %v303, 0.0
    %v388 = vmax.f32 %v306, 0.0
    %v389 = vmax.f32 %v311, 0.0
    %v390 = vmax.f32 %v314, 0.0
    %v391 = vmax.f32 %v319, 0.0
    %v392 = vmax.f32 %v322, 0.0
    %v393 = vmax.f32 %v327, 0.0
    %v394 = vmax.f32 %v330, 0.0
    %v395 = vmax.f32 %v335, 0.0
    %v396 = vmax.f32 %v338, 0.0
    %v397 = vmax.f32 %v343, 0.0
    %v398 = vmax.f32 %v346, 0.0
    %v399 = vmax.f32 %v351, 0.0
    %v400 = vmax.f32 %v354, 0.0
    %v401 = vmax.f32 %v359, 0.0
    %v402 = vmax.f32 %v362, 0.0
    %v403 = vmax.f32 %v367, 0.0
    %v404 = vmax.f32 %v370, 0.0
    %v405 = vpack.c.bf16 %v374, %v373
    %v406 = vpack.c.bf16 %v376, %v375
    %v407 = vpack.c.bf16 %v378, %v377
    %v408 = vpack.c.bf16 %v380, %v379
    %v409 = vpack.c.bf16 %v382, %v381
    %v410 = vpack.c.bf16 %v384, %v383
    %v411 = vpack.c.bf16 %v386, %v385
    %v412 = vpack.c.bf16 %v388, %v387
    %v413 = vpack.c.bf16 %v390, %v389
    %v414 = vpack.c.bf16 %v392, %v391
    %v415 = vpack.c.bf16 %v394, %v393
    %v416 = vpack.c.bf16 %v396, %v395
    %v417 = vpack.c.bf16 %v398, %v397
    %v418 = vpack.c.bf16 %v400, %v399
    %v419 = vpack.c.bf16 %v402, %v401
    %v420 = vpack.c.bf16 %v404, %v403
    %v421 = vld [vmem:[%s3] sm:$0xf]
    %v422 = vld [vmem:[%s3 + $0x4] sm:$0xf]
    %v423 = vld [vmem:[%s3 + $0x8] sm:$0xf]
    %v424 = vld [vmem:[%s3 + $0xc] sm:$0xf]
    %v425 = vld [vmem:[%s3 + $0x10] sm:$0xf]
    %v426 = vld [vmem:[%s3 + $0x14] sm:$0xf]
    %v427 = vld [vmem:[%s3 + $0x18] sm:$0xf]
    %v428 = vld [vmem:[%s3 + $0x1c] sm:$0xf]
    %v429 = vld [vmem:[%s3 + $0x20] sm:$0xf]
    %v430 = vld [vmem:[%s3 + $0x24] sm:$0xf]
    %v431 = vld [vmem:[%s3 + $0x28] sm:$0xf]
    %v432 = vld [vmem:[%s3 + $0x2c] sm:$0xf]
    %v433 = vld [vmem:[%s3 + $0x30] sm:$0xf]
    %v434 = vld [vmem:[%s3 + $0x34] sm:$0xf]
    %v435 = vld [vmem:[%s3 + $0x38] sm:$0xf]
    %v436 = vld [vmem:[%s3 + $0x3c] sm:$0xf]
    %v437 = vld [vmem:[%s4] sm:$0x1]
    %v439 = vlaneseq
    %v440 = vshrl.u32 %v439, 7
    %v441 = vsub.s32 0, %v440
    %v442 = vrot.slane %v437, %v441
    %v460 = vunpack.c.l.b16 %v421
    %v461 = vunpack.c.l.b16 %v422
    %v462 = vunpack.c.l.b16 %v423
    %v463 = vunpack.c.l.b16 %v424
    %v464 = vunpack.c.l.b16 %v425
    %v465 = vunpack.c.l.b16 %v426
    %v466 = vunpack.c.l.b16 %v427
    %v467 = vunpack.c.l.b16 %v428
    %v468 = vunpack.c.l.b16 %v429
    %v469 = vunpack.c.l.b16 %v430
    %v470 = vunpack.c.l.b16 %v431
    %v471 = vunpack.c.l.b16 %v432
    %v472 = vunpack.c.l.b16 %v433
    %v473 = vunpack.c.l.b16 %v434
    %v474 = vunpack.c.l.b16 %v435
    %v475 = vunpack.c.l.b16 %v436
    %v476 = vpack.c.b16 %v461, %v460
    %v477 = vpack.c.b16 %v463, %v462
    %v478 = vpack.c.b16 %v465, %v464
    %v479 = vpack.c.b16 %v467, %v466
    %v480 = vpack.c.b16 %v469, %v468
    %v481 = vpack.c.b16 %v471, %v470
    %v482 = vpack.c.b16 %v473, %v472
    %v483 = vpack.c.b16 %v475, %v474
    %492 = vmatprep.subr.bf16.mxu0 0
    %493 = vmatpush1.bf16.msra.mxu0 %v476
    %494 = vmatprep.subr.bf16.mxu0 0
    %495 = vmatpush1.bf16.msra.mxu0 %v477
    %496 = vmatprep.subr.bf16.mxu0 0
    %497 = vmatpush1.bf16.msra.mxu0 %v478
    %498 = vmatprep.subr.bf16.mxu0 0
    %499 = vmatpush1.bf16.msra.mxu0 %v479
    %500 = vmatprep.subr.bf16.mxu0 0
    %501 = vmatpush1.bf16.msra.mxu0 %v480
    %502 = vmatprep.subr.bf16.mxu0 0
    %503 = vmatpush1.bf16.msra.mxu0 %v481
    %504 = vmatprep.subr.bf16.mxu0 0
    %505 = vmatpush1.bf16.msra.mxu0 %v482
    %506 = vmatprep.subr.bf16.mxu0 0
    %507 = vmatpush1.bf16.msra.mxu0 %v483
    %508 = vmatprep.subr.bf16.mxu0 0
    %509 = vmatpush1.bf16.msra.mxu0 0
    %510 = vmatprep.subr.bf16.mxu0 0
    %511 = vmatpush1.bf16.msra.mxu0 0
    %512 = vmatprep.subr.bf16.mxu0 0
    %513 = vmatpush1.bf16.msra.mxu0 0
    %514 = vmatprep.subr.bf16.mxu0 0
    %515 = vmatpush1.bf16.msra.mxu0 0
    %516 = vmatprep.subr.bf16.mxu0 0
    %517 = vmatpush1.bf16.msra.mxu0 0
    %518 = vmatprep.subr.bf16.mxu0 0
    %519 = vmatpush1.bf16.msra.mxu0 0
    %520 = vmatprep.subr.bf16.mxu0 0
    %521 = vmatpush1.bf16.msra.mxu0 0
    %522 = vmatprep.subr.bf16.mxu0 0
    %523 = vmatpush1.bf16.msra.mxu0 0
    %524 = vmatprep.mubr.bf16.mxu0 0
    %525 = vmatmul.mubr.bf16.gmra.mrb[0].mxu0 %v405
    %v526 = vpop.f32.mrb[0].mxu0
    %v527 = vadd.f32 %v442, %v526
    %v528 = vpop.f32.mrb[0].mxu0
    %v529 = vpop.f32.mrb[0].mxu0
    %v530 = vadd.f32 %v442, %v529
    %v531 = vpop.f32.mrb[0].mxu0
    %532 = vmatprep.mubr.bf16.mxu0 0
    %533 = vmatmul.mubr.bf16.gmra.mrb[0].mxu0 %v406
    %v534 = vpop.f32.mrb[0].mxu0
    %v535 = vadd.f32 %v442, %v534
    %v536 = vpop.f32.mrb[0].mxu0
    %v537 = vpop.f32.mrb[0].mxu0
    %v538 = vadd.f32 %v442, %v537
    %v539 = vpop.f32.mrb[0].mxu0
    %540 = vmatprep.mubr.bf16.mxu0 0
    %541 = vmatmul.mubr.bf16.gmra.mrb[0].mxu0 %v407
    %v542 = vpop.f32.mrb[0].mxu0
    %v543 = vadd.f32 %v442, %v542
    %v544 = vpop.f32.mrb[0].mxu0
    %v545 = vpop.f32.mrb[0].mxu0
    %v546 = vadd.f32 %v442, %v545
    %v547 = vpop.f32.mrb[0].mxu0
    %548 = vmatprep.mubr.bf16.mxu0 0
    %549 = vmatmul.mubr.bf16.gmra.mrb[0].mxu0 %v408
    %v550 = vpop.f32.mrb[0].mxu0
    %v551 = vadd.f32 %v442, %v550
    %v552 = vpop.f32.mrb[0].mxu0
    %v553 = vpop.f32.mrb[0].mxu0
    %v554 = vadd.f32 %v442, %v553
    %v555 = vpop.f32.mrb[0].mxu0
    %556 = vmatprep.mubr.bf16.mxu0 0
    %557 = vmatmul.mubr.bf16.gmra.mrb[0].mxu0 %v409
    %v558 = vpop.f32.mrb[0].mxu0
    %v559 = vadd.f32 %v442, %v558
    %v560 = vpop.f32.mrb[0].mxu0
    %v561 = vpop.f32.mrb[0].mxu0
    %v562 = vadd.f32 %v442, %v561
    %v563 = vpop.f32.mrb[0].mxu0
    %564 = vmatprep.mubr.bf16.mxu0 0
    %565 = vmatmul.mubr.bf16.gmra.mrb[0].mxu0 %v410
    %v566 = vpop.f32.mrb[0].mxu0
    %v567 = vadd.f32 %v442, %v566
    %v568 = vpop.f32.mrb[0].mxu0
    %v569 = vpop.f32.mrb[0].mxu0
    %v570 = vadd.f32 %v442, %v569
    %v571 = vpop.f32.mrb[0].mxu0
    %572 = vmatprep.mubr.bf16.mxu0 0
    %573 = vmatmul.mubr.bf16.gmra.mrb[0].mxu0 %v411
    %v574 = vpop.f32.mrb[0].mxu0
    %v575 = vadd.f32 %v442, %v574
    %v576 = vpop.f32.mrb[0].mxu0
    %v577 = vpop.f32.mrb[0].mxu0
    %v578 = vadd.f32 %v442, %v577
    %v579 = vpop.f32.mrb[0].mxu0
    %580 = vmatprep.mubr.bf16.mxu0 0
    %581 = vmatmul.mubr.bf16.gmra.mrb[0].mxu0 %v412
    %v582 = vpop.f32.mrb[0].mxu0
    %v583 = vadd.f32 %v442, %v582
    %v584 = vpop.f32.mrb[0].mxu0
    %v585 = vpop.f32.mrb[0].mxu0
    %v586 = vadd.f32 %v442, %v585
    %v587 = vpop.f32.mrb[0].mxu0
    %588 = vmatprep.mubr.bf16.mxu0 0
    %589 = vmatmul.mubr.bf16.gmra.mrb[0].mxu0 %v413
    %v590 = vpop.f32.mrb[0].mxu0
    %v591 = vadd.f32 %v442, %v590
    %v592 = vpop.f32.mrb[0].mxu0
    %v593 = vpop.f32.mrb[0].mxu0
    %v594 = vadd.f32 %v442, %v593
    %v595 = vpop.f32.mrb[0].mxu0
    %596 = vmatprep.mubr.bf16.mxu0 0
    %597 = vmatmul.mubr.bf16.gmra.mrb[0].mxu0 %v414
    %v598 = vpop.f32.mrb[0].mxu0
    %v599 = vadd.f32 %v442, %v598
    %v600 = vpop.f32.mrb[0].mxu0
    %v601 = vpop.f32.mrb[0].mxu0
    %v602 = vadd.f32 %v442, %v601
    %v603 = vpop.f32.mrb[0].mxu0
    %604 = vmatprep.mubr.bf16.mxu0 0
    %605 = vmatmul.mubr.bf16.gmra.mrb[0].mxu0 %v415
    %v606 = vpop.f32.mrb[0].mxu0
    %v607 = vadd.f32 %v442, %v606
    %v608 = vpop.f32.mrb[0].mxu0
    %v609 = vpop.f32.mrb[0].mxu0
    %v610 = vadd.f32 %v442, %v609
    %v611 = vpop.f32.mrb[0].mxu0
    %612 = vmatprep.mubr.bf16.mxu0 0
    %613 = vmatmul.mubr.bf16.gmra.mrb[0].mxu0 %v416
    %v614 = vpop.f32.mrb[0].mxu0
    %v615 = vadd.f32 %v442, %v614
    %v616 = vpop.f32.mrb[0].mxu0
    %v617 = vpop.f32.mrb[0].mxu0
    %v618 = vadd.f32 %v442, %v617
    %v619 = vpop.f32.mrb[0].mxu0
    %620 = vmatprep.mubr.bf16.mxu0 0
    %621 = vmatmul.mubr.bf16.gmra.mrb[0].mxu0 %v417
    %v622 = vpop.f32.mrb[0].mxu0
    %v623 = vadd.f32 %v442, %v622
    %v624 = vpop.f32.mrb[0].mxu0
    %v625 = vpop.f32.mrb[0].mxu0
    %v626 = vadd.f32 %v442, %v625
    %v627 = vpop.f32.mrb[0].mxu0
    %628 = vmatprep.mubr.bf16.mxu0 0
    %629 = vmatmul.mubr.bf16.gmra.mrb[0].mxu0 %v418
    %v630 = vpop.f32.mrb[0].mxu0
    %v631 = vadd.f32 %v442, %v630
    %v632 = vpop.f32.mrb[0].mxu0
    %v633 = vpop.f32.mrb[0].mxu0
    %v634 = vadd.f32 %v442, %v633
    %v635 = vpop.f32.mrb[0].mxu0
    %636 = vmatprep.mubr.bf16.mxu0 0
    %637 = vmatmul.mubr.bf16.gmra.mrb[0].mxu0 %v419
    %v638 = vpop.f32.mrb[0].mxu0
    %v639 = vadd.f32 %v442, %v638
    %v640 = vpop.f32.mrb[0].mxu0
    %v641 = vpop.f32.mrb[0].mxu0
    %v642 = vadd.f32 %v442, %v641
    %v643 = vpop.f32.mrb[0].mxu0
    %644 = vmatprep.mubr.bf16.mxu0 0
    %645 = vmatmul.mubr.bf16.gmra.mrb[0].mxu0 %v420
    %v646 = vpop.f32.mrb[0].mxu0
    %v647 = vadd.f32 %v442, %v646
    %v648 = vpop.f32.mrb[0].mxu0
    %v649 = vpop.f32.mrb[0].mxu0
    %v650 = vadd.f32 %v442, %v649
    %v651 = vpop.f32.mrb[0].mxu0
    %652 = vdwg.mxu0
    %v653 = vmax.f32 %v527, 0.0
    %v654 = vmax.f32 %v530, 0.0
    %v655 = vmax.f32 %v535, 0.0
    %v656 = vmax.f32 %v538, 0.0
    %v657 = vmax.f32 %v543, 0.0
    %v658 = vmax.f32 %v546, 0.0
    %v659 = vmax.f32 %v551, 0.0
    %v660 = vmax.f32 %v554, 0.0
    %v661 = vmax.f32 %v559, 0.0
    %v662 = vmax.f32 %v562, 0.0
    %v663 = vmax.f32 %v567, 0.0
    %v664 = vmax.f32 %v570, 0.0
    %v665 = vmax.f32 %v575, 0.0
    %v666 = vmax.f32 %v578, 0.0
    %v667 = vmax.f32 %v583, 0.0
    %v668 = vmax.f32 %v586, 0.0
    %v669 = vmax.f32 %v591, 0.0
    %v670 = vmax.f32 %v594, 0.0
    %v671 = vmax.f32 %v599, 0.0
    %v672 = vmax.f32 %v602, 0.0
    %v673 = vmax.f32 %v607, 0.0
    %v674 = vmax.f32 %v610, 0.0
    %v675 = vmax.f32 %v615, 0.0
    %v676 = vmax.f32 %v618, 0.0
    %v677 = vmax.f32 %v623, 0.0
    %v678 = vmax.f32 %v626, 0.0
    %v679 = vmax.f32 %v631, 0.0
    %v680 = vmax.f32 %v634, 0.0
    %v681 = vmax.f32 %v639, 0.0
    %v682 = vmax.f32 %v642, 0.0
    %v683 = vmax.f32 %v647, 0.0
    %v684 = vmax.f32 %v650, 0.0
    %v685 = vpack.c.bf16 %v654, %v653
    %v686 = vpack.c.bf16 %v656, %v655
    %v687 = vpack.c.bf16 %v658, %v657
    %v688 = vpack.c.bf16 %v660, %v659
    %v689 = vpack.c.bf16 %v662, %v661
    %v690 = vpack.c.bf16 %v664, %v663
    %v691 = vpack.c.bf16 %v666, %v665
    %v692 = vpack.c.bf16 %v668, %v667
    %v693 = vpack.c.bf16 %v670, %v669
    %v694 = vpack.c.bf16 %v672, %v671
    %v695 = vpack.c.bf16 %v674, %v673
    %v696 = vpack.c.bf16 %v676, %v675
    %v697 = vpack.c.bf16 %v678, %v677
    %v698 = vpack.c.bf16 %v680, %v679
    %v699 = vpack.c.bf16 %v682, %v681
    %v700 = vpack.c.bf16 %v684, %v683
    %v701 = vld [vmem:[%s5] sm:$0xf]
    %v702 = vld [vmem:[%s5 + $0x4] sm:$0xf]
    %v703 = vld [vmem:[%s5 + $0x8] sm:$0xf]
    %v704 = vld [vmem:[%s5 + $0xc] sm:$0xf]
    %v705 = vld [vmem:[%s5 + $0x10] sm:$0xf]
    %v706 = vld [vmem:[%s5 + $0x14] sm:$0xf]
    %v707 = vld [vmem:[%s5 + $0x18] sm:$0xf]
    %v708 = vld [vmem:[%s5 + $0x1c] sm:$0xf]
    %v709 = vld [vmem:[%s5 + $0x20] sm:$0xf]
    %v710 = vld [vmem:[%s5 + $0x24] sm:$0xf]
    %v711 = vld [vmem:[%s5 + $0x28] sm:$0xf]
    %v712 = vld [vmem:[%s5 + $0x2c] sm:$0xf]
    %v713 = vld [vmem:[%s5 + $0x30] sm:$0xf]
    %v714 = vld [vmem:[%s5 + $0x34] sm:$0xf]
    %v715 = vld [vmem:[%s5 + $0x38] sm:$0xf]
    %v716 = vld [vmem:[%s5 + $0x3c] sm:$0xf]
    %v717 = vld [vmem:[%s6] sm:$0x1]
    %v719 = vlaneseq
    %v720 = vshrl.u32 %v719, 7
    %v721 = vsub.s32 0, %v720
    %v722 = vrot.slane %v717, %v721
    %v740 = vunpack.c.l.b16 %v701
    %v741 = vunpack.c.l.b16 %v702
    %v742 = vunpack.c.l.b16 %v703
    %v743 = vunpack.c.l.b16 %v704
    %v744 = vunpack.c.l.b16 %v705
    %v745 = vunpack.c.l.b16 %v706
    %v746 = vunpack.c.l.b16 %v707
    %v747 = vunpack.c.l.b16 %v708
    %v748 = vunpack.c.l.b16 %v709
    %v749 = vunpack.c.l.b16 %v710
    %v750 = vunpack.c.l.b16 %v711
    %v751 = vunpack.c.l.b16 %v712
    %v752 = vunpack.c.l.b16 %v713
    %v753 = vunpack.c.l.b16 %v714
    %v754 = vunpack.c.l.b16 %v715
    %v755 = vunpack.c.l.b16 %v716
    %v756 = vpack.c.b16 %v741, %v740
    %v757 = vpack.c.b16 %v743, %v742
    %v758 = vpack.c.b16 %v745, %v744
    %v759 = vpack.c.b16 %v747, %v746
    %v760 = vpack.c.b16 %v749, %v748
    %v761 = vpack.c.b16 %v751, %v750
    %v762 = vpack.c.b16 %v753, %v752
    %v763 = vpack.c.b16 %v755, %v754
    %772 = vmatprep.subr.bf16.mxu0 0
    %773 = vmatpush1.bf16.msra.mxu0 %v756
    %774 = vmatprep.subr.bf16.mxu0 0
    %775 = vmatpush1.bf16.msra.mxu0 %v757
    %776 = vmatprep.subr.bf16.mxu0 0
    %777 = vmatpush1.bf16.msra.mxu0 %v758
    %778 = vmatprep.subr.bf16.mxu0 0
    %779 = vmatpush1.bf16.msra.mxu0 %v759
    %780 = vmatprep.subr.bf16.mxu0 0
    %781 = vmatpush1.bf16.msra.mxu0 %v760
    %782 = vmatprep.subr.bf16.mxu0 0
    %783 = vmatpush1.bf16.msra.mxu0 %v761
    %784 = vmatprep.subr.bf16.mxu0 0
    %785 = vmatpush1.bf16.msra.mxu0 %v762
    %786 = vmatprep.subr.bf16.mxu0 0
    %787 = vmatpush1.bf16.msra.mxu0 %v763
    %788 = vmatprep.subr.bf16.mxu0 0
    %789 = vmatpush1.bf16.msra.mxu0 0
    %790 = vmatprep.subr.bf16.mxu0 0
    %791 = vmatpush1.bf16.msra.mxu0 0
    %792 = vmatprep.subr.bf16.mxu0 0
    %793 = vmatpush1.bf16.msra.mxu0 0
    %794 = vmatprep.subr.bf16.mxu0 0
    %795 = vmatpush1.bf16.msra.mxu0 0
    %796 = vmatprep.subr.bf16.mxu0 0
    %797 = vmatpush1.bf16.msra.mxu0 0
    %798 = vmatprep.subr.bf16.mxu0 0
    %799 = vmatpush1.bf16.msra.mxu0 0
    %800 = vmatprep.subr.bf16.mxu0 0
    %801 = vmatpush1.bf16.msra.mxu0 0
    %802 = vmatprep.subr.bf16.mxu0 0
    %803 = vmatpush1.bf16.msra.mxu0 0
    %804 = vmatprep.mubr.bf16.mxu0 0
    %805 = vmatmul.mubr.bf16.gmra.mrb[0].mxu0 %v685
    %v806 = vpop.f32.mrb[0].mxu0
    %v807 = vadd.f32 %v722, %v806
    %v808 = vpop.f32.mrb[0].mxu0
    %v809 = vpop.f32.mrb[0].mxu0
    %v810 = vadd.f32 %v722, %v809
    %v811 = vpop.f32.mrb[0].mxu0
    %812 = vmatprep.mubr.bf16.mxu0 0
    %813 = vmatmul.mubr.bf16.gmra.mrb[0].mxu0 %v686
    %v814 = vpop.f32.mrb[0].mxu0
    %v815 = vadd.f32 %v722, %v814
    %v816 = vpop.f32.mrb[0].mxu0
    %v817 = vpop.f32.mrb[0].mxu0
    %v818 = vadd.f32 %v722, %v817
    %v819 = vpop.f32.mrb[0].mxu0
    %820 = vmatprep.mubr.bf16.mxu0 0
    %821 = vmatmul.mubr.bf16.gmra.mrb[0].mxu0 %v687
    %v822 = vpop.f32.mrb[0].mxu0
    %v823 = vadd.f32 %v722, %v822
    %v824 = vpop.f32.mrb[0].mxu0
    %v825 = vpop.f32.mrb[0].mxu0
    %v826 = vadd.f32 %v722, %v825
    %v827 = vpop.f32.mrb[0].mxu0
    %828 = vmatprep.mubr.bf16.mxu0 0
    %829 = vmatmul.mubr.bf16.gmra.mrb[0].mxu0 %v688
    %v830 = vpop.f32.mrb[0].mxu0
    %v831 = vadd.f32 %v722, %v830
    %v832 = vpop.f32.mrb[0].mxu0
    %v833 = vpop.f32.mrb[0].mxu0
    %v834 = vadd.f32 %v722, %v833
    %v835 = vpop.f32.mrb[0].mxu0
    %836 = vmatprep.mubr.bf16.mxu0 0
    %837 = vmatmul.mubr.bf16.gmra.mrb[0].mxu0 %v689
    %v838 = vpop.f32.mrb[0].mxu0
    %v839 = vadd.f32 %v722, %v838
    %v840 = vpop.f32.mrb[0].mxu0
    %v841 = vpop.f32.mrb[0].mxu0
    %v842 = vadd.f32 %v722, %v841
    %v843 = vpop.f32.mrb[0].mxu0
    %844 = vmatprep.mubr.bf16.mxu0 0
    %845 = vmatmul.mubr.bf16.gmra.mrb[0].mxu0 %v690
    %v846 = vpop.f32.mrb[0].mxu0
    %v847 = vadd.f32 %v722, %v846
    %v848 = vpop.f32.mrb[0].mxu0
    %v849 = vpop.f32.mrb[0].mxu0
    %v850 = vadd.f32 %v722, %v849
    %v851 = vpop.f32.mrb[0].mxu0
    %852 = vmatprep.mubr.bf16.mxu0 0
    %853 = vmatmul.mubr.bf16.gmra.mrb[0].mxu0 %v691
    %v854 = vpop.f32.mrb[0].mxu0
    %v855 = vadd.f32 %v722, %v854
    %v856 = vpop.f32.mrb[0].mxu0
    %v857 = vpop.f32.mrb[0].mxu0
    %v858 = vadd.f32 %v722, %v857
    %v859 = vpop.f32.mrb[0].mxu0
    %860 = vmatprep.mubr.bf16.mxu0 0
    %861 = vmatmul.mubr.bf16.gmra.mrb[0].mxu0 %v692
    %v862 = vpop.f32.mrb[0].mxu0
    %v863 = vadd.f32 %v722, %v862
    %v864 = vpop.f32.mrb[0].mxu0
    %v865 = vpop.f32.mrb[0].mxu0
    %v866 = vadd.f32 %v722, %v865
    %v867 = vpop.f32.mrb[0].mxu0
    %868 = vmatprep.mubr.bf16.mxu0 0
    %869 = vmatmul.mubr.bf16.gmra.mrb[0].mxu0 %v693
    %v870 = vpop.f32.mrb[0].mxu0
    %v871 = vadd.f32 %v722, %v870
    %v872 = vpop.f32.mrb[0].mxu0
    %v873 = vpop.f32.mrb[0].mxu0
    %v874 = vadd.f32 %v722, %v873
    %v875 = vpop.f32.mrb[0].mxu0
    %876 = vmatprep.mubr.bf16.mxu0 0
    %877 = vmatmul.mubr.bf16.gmra.mrb[0].mxu0 %v694
    %v878 = vpop.f32.mrb[0].mxu0
    %v879 = vadd.f32 %v722, %v878
    %v880 = vpop.f32.mrb[0].mxu0
    %v881 = vpop.f32.mrb[0].mxu0
    %v882 = vadd.f32 %v722, %v881
    %v883 = vpop.f32.mrb[0].mxu0
    %884 = vmatprep.mubr.bf16.mxu0 0
    %885 = vmatmul.mubr.bf16.gmra.mrb[0].mxu0 %v695
    %v886 = vpop.f32.mrb[0].mxu0
    %v887 = vadd.f32 %v722, %v886
    %v888 = vpop.f32.mrb[0].mxu0
    %v889 = vpop.f32.mrb[0].mxu0
    %v890 = vadd.f32 %v722, %v889
    %v891 = vpop.f32.mrb[0].mxu0
    %892 = vmatprep.mubr.bf16.mxu0 0
    %893 = vmatmul.mubr.bf16.gmra.mrb[0].mxu0 %v696
    %v894 = vpop.f32.mrb[0].mxu0
    %v895 = vadd.f32 %v722, %v894
    %v896 = vpop.f32.mrb[0].mxu0
    %v897 = vpop.f32.mrb[0].mxu0
    %v898 = vadd.f32 %v722, %v897
    %v899 = vpop.f32.mrb[0].mxu0
    %900 = vmatprep.mubr.bf16.mxu0 0
    %901 = vmatmul.mubr.bf16.gmra.mrb[0].mxu0 %v697
    %v902 = vpop.f32.mrb[0].mxu0
    %v903 = vadd.f32 %v722, %v902
    %v904 = vpop.f32.mrb[0].mxu0
    %v905 = vpop.f32.mrb[0].mxu0
    %v906 = vadd.f32 %v722, %v905
    %v907 = vpop.f32.mrb[0].mxu0
    %908 = vmatprep.mubr.bf16.mxu0 0
    %909 = vmatmul.mubr.bf16.gmra.mrb[0].mxu0 %v698
    %v910 = vpop.f32.mrb[0].mxu0
    %v911 = vadd.f32 %v722, %v910
    %v912 = vpop.f32.mrb[0].mxu0
    %v913 = vpop.f32.mrb[0].mxu0
    %v914 = vadd.f32 %v722, %v913
    %v915 = vpop.f32.mrb[0].mxu0
    %916 = vmatprep.mubr.bf16.mxu0 0
    %917 = vmatmul.mubr.bf16.gmra.mrb[0].mxu0 %v699
    %v918 = vpop.f32.mrb[0].mxu0
    %v919 = vadd.f32 %v722, %v918
    %v920 = vpop.f32.mrb[0].mxu0
    %v921 = vpop.f32.mrb[0].mxu0
    %v922 = vadd.f32 %v722, %v921
    %v923 = vpop.f32.mrb[0].mxu0
    %924 = vmatprep.mubr.bf16.mxu0 0
    %925 = vmatmul.mubr.bf16.gmra.mrb[0].mxu0 %v700
    %v926 = vpop.f32.mrb[0].mxu0
    %v927 = vadd.f32 %v722, %v926
    %v928 = vpop.f32.mrb[0].mxu0
    %v929 = vpop.f32.mrb[0].mxu0
    %v930 = vadd.f32 %v722, %v929
    %v931 = vpop.f32.mrb[0].mxu0
    %932 = vdwg.mxu0
    %933 = vst [vmem:[#allocation2] sm:$0xff] %v807
    %934 = vst [vmem:[#allocation2 + $0x8] sm:$0xff] %v810
    %935 = vst [vmem:[#allocation2 + $0x10] sm:$0xff] %v815
    %936 = vst [vmem:[#allocation2 + $0x18] sm:$0xff] %v818
    %937 = vst [vmem:[#allocation2 + $0x20] sm:$0xff] %v823
    %938 = vst [vmem:[#allocation2 + $0x28] sm:$0xff] %v826
    %939 = vst [vmem:[#allocation2 + $0x30] sm:$0xff] %v831
    %940 = vst [vmem:[#allocation2 + $0x38] sm:$0xff] %v834
    %941 = vst [vmem:[#allocation2 + $0x40] sm:$0xff] %v839
    %942 = vst [vmem:[#allocation2 + $0x48] sm:$0xff] %v842
    %943 = vst [vmem:[#allocation2 + $0x50] sm:$0xff] %v847
    %944 = vst [vmem:[#allocation2 + $0x58] sm:$0xff] %v850
    %945 = vst [vmem:[#allocation2 + $0x60] sm:$0xff] %v855
    %946 = vst [vmem:[#allocation2 + $0x68] sm:$0xff] %v858
    %947 = vst [vmem:[#allocation2 + $0x70] sm:$0xff] %v863
    %948 = vst [vmem:[#allocation2 + $0x78] sm:$0xff] %v866
    %949 = vst [vmem:[#allocation2 + $0x80] sm:$0xff] %v871
    %950 = vst [vmem:[#allocation2 + $0x88] sm:$0xff] %v874
    %951 = vst [vmem:[#allocation2 + $0x90] sm:$0xff] %v879
    %952 = vst [vmem:[#allocation2 + $0x98] sm:$0xff] %v882
    %953 = vst [vmem:[#allocation2 + $0xa0] sm:$0xff] %v887
    %954 = vst [vmem:[#allocation2 + $0xa8] sm:$0xff] %v890
    %955 = vst [vmem:[#allocation2 + $0xb0] sm:$0xff] %v895
    %956 = vst [vmem:[#allocation2 + $0xb8] sm:$0xff] %v898
    %957 = vst [vmem:[#allocation2 + $0xc0] sm:$0xff] %v903
    %958 = vst [vmem:[#allocation2 + $0xc8] sm:$0xff] %v906
    %959 = vst [vmem:[#allocation2 + $0xd0] sm:$0xff] %v911
    %960 = vst [vmem:[#allocation2 + $0xd8] sm:$0xff] %v914
    %961 = vst [vmem:[#allocation2 + $0xe0] sm:$0xff] %v919
    %962 = vst [vmem:[#allocation2 + $0xe8] sm:$0xff] %v922
    %963 = vst [vmem:[#allocation2 + $0xf0] sm:$0xff] %v927
    %964 = vst [vmem:[#allocation2 + $0xf8] sm:$0xff] %v930
    // Predicated region
    $region30: #{tpu_custom_call.1} parent=1 // pred_check
      _
    $region31: #{tpu_custom_call.1} parent=1 // pred_check_branch
      %966 = sbr.rel (0) target = $region33
    $region32: #{tpu_custom_call.1} parent=1 // pred_region
      %s968 = ssub.s32 4096, 4096
      %969 = vsyncadd [#allocation3], %s968
      %s970 = sshll.u32 [#allocation2], 4
      %s971 = int_to_ptr.vmem [resolvable:$true] %s970
      %976 = dma.vmem_to_hbm [thread:$0]  %s971, 4096, %s7, [#allocation3], 128, 128, 8
    $region33: #{tpu_custom_call.1} parent=1 // pred_fallthru
      _
    // Predicated region
    $region34: #{tpu_custom_call.1} parent=1 // pred_check
      _
    $region35: #{tpu_custom_call.1} parent=1 // pred_check_branch
      %978 = sbr.rel (0) target = $region37
    $region36: #{tpu_custom_call.1} parent=1 // pred_region
      %979 = dma.done [#allocation3], 4096
    $region37: #{tpu_custom_call.1} parent=1 // pred_fallthru
      _
    %980 = vsyncpa [#allocation3], 1

</llo_original>
